<compile_context>
chip_gen: v5e
topology: v5e:2x2
jax: 0.10.0
libtpu: 0.0.40
codegen_flags: <defaults>
</compile_context>

<pallas_src>
import functools

import jax
import jax.numpy as jnp
from jax import lax
from jax.experimental import pallas as pl
from jax.experimental.pallas import tpu as pltpu


def _round_up(n: int, m: int) -> int:
    return ((n + m - 1) // m) * m


def mlp_kernel(x_ref, w1_ref, b1_ref, w2_ref, b2_ref, w3_ref, b3_ref,
               w4_ref, b4_ref, o_ref):
    """One batch tile, feature-major.

    x_ref : (D, tb) f32   -- batch on the lane axis
    wN    : (out, in)     -- compute dtype (f32 or bf16); w4 stored as (16, 1) f32
    bN    : (out, 1) f32
    o_ref : (1, tb) f32   -- lane-dense store
    """
    cdt = w1_ref.dtype
    x = x_ref[...].astype(cdt)          # in-kernel cast (VPU, hidden under MXU)

    h = jnp.dot(w1_ref[...], x, preferred_element_type=jnp.float32,
                precision=lax.Precision.HIGHEST)
    h = jnp.maximum(h + b1_ref[...], 0.0)                       # (64, tb) f32

    h = jnp.dot(w2_ref[...], h.astype(cdt), preferred_element_type=jnp.float32,
                precision=lax.Precision.HIGHEST)
    h = jnp.maximum(h + b2_ref[...], 0.0)                       # (32, tb) f32

    h = jnp.dot(w3_ref[...], h.astype(cdt), preferred_element_type=jnp.float32,
                precision=lax.Precision.HIGHEST)
    h = jnp.maximum(h + b3_ref[...], 0.0)                       # (16, tb) f32

    # Layer 4 (16 -> 1): VPU multiply + sublane reduce instead of an MXU pass.
    out = jnp.sum(h * w4_ref[...], axis=0, keepdims=True) + b4_ref[...]
    o_ref[...] = out.astype(o_ref.dtype)                        # (1, tb)


@functools.partial(jax.jit, static_argnames=("tile_b", "use_bf16"))
def mlp_forward(x, params, *, tile_b=2048, use_bf16=False):
    """x: (B, input_dim) f32.  params in PyTorch nn.Linear layout."""
    B, D = x.shape
    cdt = jnp.bfloat16 if use_bf16 else jnp.float32

    # Feature-major: put batch on the lane axis (one cheap layout pass; the
    # bf16 cast of x and any large padding stay OUT of the wrapper).
    xT = x.T                                           # (D, B) f32
    Bp = B
    if B < 128:                                        # tiny batch: one lane tile
        xT = jnp.pad(xT, ((0, 0), (0, 128 - B)))
        Bp = 128

    # Lane tile: multiple of 128, never wider than the batch.
    tb = min(_round_up(tile_b, 128), 128 * (Bp // 128))
    # Keep >= 2 grid steps when there is enough batch, so the pipeline has
    # work to overlap and v7x can shard the grid across both TensorCores.
    if pl.cdiv(Bp, tb) < 2 and Bp >= 256:
        tb = _round_up(pl.cdiv(Bp, 2), 128)
    grid = pl.cdiv(Bp, tb)        # ragged final block is masked by Pallas

    w1 = params["w1"].astype(cdt)                      # (64, D)
    w2 = params["w2"].astype(cdt)                      # (32, 64)
    w3 = params["w3"].astype(cdt)                      # (16, 32)
    w4 = params["w4"].reshape(-1, 1)                   # (1, 16) -> (16, 1), f32
    b1 = params["b1"].reshape(-1, 1)                   # (64, 1) f32
    b2 = params["b2"].reshape(-1, 1)                   # (32, 1)
    b3 = params["b3"].reshape(-1, 1)                   # (16, 1)
    b4 = params["b4"].reshape(-1, 1)                   # (1, 1)

    param_ops = (w1, b1, w2, b2, w3, b3, w4, b4)
    # Constant index_maps: params DMA'd to VMEM once, resident across the grid.
    param_specs = [pl.BlockSpec(p.shape, lambda i: (0, 0)) for p in param_ops]

    out = pl.pallas_call(
        mlp_kernel,
        out_shape=jax.ShapeDtypeStruct((1, Bp), jnp.float32),
        grid=(grid,),
        in_specs=[pl.BlockSpec((D, tb), lambda i: (0, i))] + param_specs,
        out_specs=pl.BlockSpec((1, tb), lambda i: (0, i)),
        compiler_params=pltpu.CompilerParams(
            dimension_semantics=("parallel",)),        # 2-TC sharding on v7x
    )(xT, *param_ops)

    return out[0, :B].reshape(B, 1)


def init_params(key, input_dim=8):
    """Deterministic PyTorch-style params: weight (out, in), bias (out,)."""
    dims = [(input_dim, 64), (64, 32), (32, 16), (16, 1)]
    params = {}
    for i, (fan_in, fan_out) in enumerate(dims, start=1):
        key, kw, kb = jax.random.split(key, 3)
        bound = 1.0 / (fan_in ** 0.5)
        params[f"w{i}"] = jax.random.uniform(
            kw, (fan_out, fan_in), jnp.float32, minval=-bound, maxval=bound)
        params[f"b{i}"] = jax.random.uniform(
            kb, (fan_out,), jnp.float32, minval=-bound, maxval=bound)
    return params


def mlp_reference(x, params, use_bf16=False):
    """Pure-JAX reference matching the kernel's numerics (batch-major)."""
    cdt = jnp.bfloat16 if use_bf16 else jnp.float32
    h = x
    for i in (1, 2, 3):
        w = params[f"w{i}"].astype(cdt)                # (out, in)
        h = jnp.dot(h.astype(cdt), w.T, preferred_element_type=jnp.float32,
                    precision=lax.Precision.HIGHEST) + params[f"b{i}"]
        h = jnp.maximum(h, 0.0)
    # Final layer stays f32 (the kernel computes it on the VPU in f32).
    return jnp.dot(h, params["w4"].T, preferred_element_type=jnp.float32,
                   precision=lax.Precision.HIGHEST) + params["b4"]


if __name__ == "__main__":
    key = jax.random.PRNGKey(0)
    key, kx, kxb = jax.random.split(key, 3)

    input_dim = 8
    params = init_params(key, input_dim=input_dim)

    # --- small batch, exact f32 path (PyTorch-faithful numerics) ---
    batch = 8
    x = jax.random.normal(kx, (batch, input_dim), dtype=jnp.float32)
    out = jax.block_until_ready(mlp_forward(x, params))
    ref = mlp_reference(x, params)
    assert out.shape == (batch, 1), out.shape
    assert jnp.allclose(out, ref, atol=1e-4, rtol=1e-4), "f32 mismatch"

    # --- optional bf16 matmul-operand path vs matched bf16 reference ---
    out_bf = jax.block_until_ready(mlp_forward(x, params, use_bf16=True))
    ref_bf = mlp_reference(x, params, use_bf16=True)
    assert jnp.allclose(out_bf, ref_bf, atol=1e-2, rtol=1e-2), "bf16 mismatch"

    # --- larger ragged batch: exercises the multi-step grid + masked tail ---
    big = 300
    xb = jax.random.normal(kxb, (big, input_dim), dtype=jnp.float32)
    out_big = jax.block_until_ready(mlp_forward(xb, params, tile_b=128))
    ref_big = mlp_reference(xb, params)
    assert out_big.shape == (big, 1), out_big.shape
    assert jnp.allclose(out_big, ref_big, atol=1e-4, rtol=1e-4), "tiled mismatch"

    print("KERNEL_OK")
</pallas_src>

<mosaic_0001>
module attributes {stable_mosaic.version = 11 : i64} {
  func.func @mlp_kernel(%arg0: i32, %arg1: memref<8x128xf32, #tpu.memory_space<vmem>>, %arg2: memref<64x8xf32, #tpu.memory_space<vmem>>, %arg3: memref<64x1xf32, #tpu.memory_space<vmem>>, %arg4: memref<32x64xf32, #tpu.memory_space<vmem>>, %arg5: memref<32x1xf32, #tpu.memory_space<vmem>>, %arg6: memref<16x32xf32, #tpu.memory_space<vmem>>, %arg7: memref<16x1xf32, #tpu.memory_space<vmem>>, %arg8: memref<16x1xf32, #tpu.memory_space<vmem>>, %arg9: memref<1x1xf32, #tpu.memory_space<vmem>>, %arg10: memref<1x128xf32, #tpu.memory_space<vmem>>) attributes {dimension_semantics = [#tpu.dimension_semantics<parallel>], iteration_bounds = array<i64: 1>, scalar_prefetch = 0 : i64, scratch_operands = 0 : i64, tpu.core_type = #tpu.core_type<tc>, window_params = [{transform_indices = @transform_0, window_bounds = array<i64: 8, 128>}, {pipeline_mode = #tpu.pipeline_mode<synchronous>, transform_indices = @transform_1, window_bounds = array<i64: 64, 8>}, {pipeline_mode = #tpu.pipeline_mode<synchronous>, transform_indices = @transform_2, window_bounds = array<i64: 64, 1>}, {pipeline_mode = #tpu.pipeline_mode<synchronous>, transform_indices = @transform_3, window_bounds = array<i64: 32, 64>}, {pipeline_mode = #tpu.pipeline_mode<synchronous>, transform_indices = @transform_4, window_bounds = array<i64: 32, 1>}, {pipeline_mode = #tpu.pipeline_mode<synchronous>, transform_indices = @transform_5, window_bounds = array<i64: 16, 32>}, {pipeline_mode = #tpu.pipeline_mode<synchronous>, transform_indices = @transform_6, window_bounds = array<i64: 16, 1>}, {pipeline_mode = #tpu.pipeline_mode<synchronous>, transform_indices = @transform_7, window_bounds = array<i64: 16, 1>}, {pipeline_mode = #tpu.pipeline_mode<synchronous>, transform_indices = @transform_8, window_bounds = array<i64: 1, 1>}, {transform_indices = @transform_9, window_bounds = array<i64: 1, 128>}]} {
    %c0 = arith.constant 0 : index
    %c0_0 = arith.constant 0 : index
    %0 = vector.load %arg1[%c0, %c0_0] : memref<8x128xf32, #tpu.memory_space<vmem>>, vector<8x128xf32>
    %c0_1 = arith.constant 0 : index
    %c0_2 = arith.constant 0 : index
    %1 = vector.load %arg2[%c0_1, %c0_2] : memref<64x8xf32, #tpu.memory_space<vmem>>, vector<64x8xf32>
    %cst = arith.constant dense<0.000000e+00> : vector<64x128xf32>
    %2 = tpu.matmul %1, %0, %cst {dimension_numbers = #tpu.dot_dimension_numbers<[1], [0], [0], [1], [0, 0, 1, 1], [], []>, precision = #tpu.contract_precision<fp32>} : vector<64x8xf32>, vector<8x128xf32>, vector<64x128xf32> -> vector<64x128xf32>
    %c0_3 = arith.constant 0 : index
    %c0_4 = arith.constant 0 : index
    %3 = vector.load %arg3[%c0_3, %c0_4] : memref<64x1xf32, #tpu.memory_space<vmem>>, vector<64x1xf32>
    %4 = vector.broadcast %3 : vector<64x1xf32> to vector<64x128xf32>
    %5 = arith.addf %2, %4 : vector<64x128xf32>
    %cst_5 = arith.constant 0.000000e+00 : f32
    %6 = vector.broadcast %cst_5 : f32 to vector<64x128xf32>
    %7 = arith.maximumf %5, %6 : vector<64x128xf32>
    %c0_6 = arith.constant 0 : index
    %c0_7 = arith.constant 0 : index
    %8 = vector.load %arg4[%c0_6, %c0_7] : memref<32x64xf32, #tpu.memory_space<vmem>>, vector<32x64xf32>
    %cst_8 = arith.constant dense<0.000000e+00> : vector<32x128xf32>
    %9 = tpu.matmul %8, %7, %cst_8 {dimension_numbers = #tpu.dot_dimension_numbers<[1], [0], [0], [1], [0, 0, 1, 1], [], []>, precision = #tpu.contract_precision<fp32>} : vector<32x64xf32>, vector<64x128xf32>, vector<32x128xf32> -> vector<32x128xf32>
    %c0_9 = arith.constant 0 : index
    %c0_10 = arith.constant 0 : index
    %10 = vector.load %arg5[%c0_9, %c0_10] : memref<32x1xf32, #tpu.memory_space<vmem>>, vector<32x1xf32>
    %11 = vector.broadcast %10 : vector<32x1xf32> to vector<32x128xf32>
    %12 = arith.addf %9, %11 : vector<32x128xf32>
    %cst_11 = arith.constant 0.000000e+00 : f32
    %13 = vector.broadcast %cst_11 : f32 to vector<32x128xf32>
    %14 = arith.maximumf %12, %13 : vector<32x128xf32>
    %c0_12 = arith.constant 0 : index
    %c0_13 = arith.constant 0 : index
    %15 = vector.load %arg6[%c0_12, %c0_13] : memref<16x32xf32, #tpu.memory_space<vmem>>, vector<16x32xf32>
    %cst_14 = arith.constant dense<0.000000e+00> : vector<16x128xf32>
    %16 = tpu.matmul %15, %14, %cst_14 {dimension_numbers = #tpu.dot_dimension_numbers<[1], [0], [0], [1], [0, 0, 1, 1], [], []>, precision = #tpu.contract_precision<fp32>} : vector<16x32xf32>, vector<32x128xf32>, vector<16x128xf32> -> vector<16x128xf32>
    %c0_15 = arith.constant 0 : index
    %c0_16 = arith.constant 0 : index
    %17 = vector.load %arg7[%c0_15, %c0_16] : memref<16x1xf32, #tpu.memory_space<vmem>>, vector<16x1xf32>
    %18 = vector.broadcast %17 : vector<16x1xf32> to vector<16x128xf32>
    %19 = arith.addf %16, %18 : vector<16x128xf32>
    %cst_17 = arith.constant 0.000000e+00 : f32
    %20 = vector.broadcast %cst_17 : f32 to vector<16x128xf32>
    %21 = arith.maximumf %19, %20 : vector<16x128xf32>
    %c0_18 = arith.constant 0 : index
    %c0_19 = arith.constant 0 : index
    %22 = vector.load %arg8[%c0_18, %c0_19] : memref<16x1xf32, #tpu.memory_space<vmem>>, vector<16x1xf32>
    %23 = vector.broadcast %22 : vector<16x1xf32> to vector<16x128xf32>
    %24 = arith.mulf %21, %23 : vector<16x128xf32>
    %cst_20 = arith.constant dense<0.000000e+00> : vector<128xf32>
    %25 = vector.multi_reduction <add>, %24, %cst_20 [0] : vector<16x128xf32> to vector<128xf32>
    %26 = vector.shape_cast %25 : vector<128xf32> to vector<1x128xf32>
    %c0_21 = arith.constant 0 : index
    %c0_22 = arith.constant 0 : index
    %27 = vector.load %arg9[%c0_21, %c0_22] : memref<1x1xf32, #tpu.memory_space<vmem>>, vector<1x1xf32>
    %28 = vector.broadcast %27 : vector<1x1xf32> to vector<1x128xf32>
    %29 = arith.addf %26, %28 : vector<1x128xf32>
    %c0_23 = arith.constant 0 : index
    %c0_24 = arith.constant 0 : index
    %30 = vector.load %arg10[%c0_23, %c0_24] : memref<1x128xf32, #tpu.memory_space<vmem>>, vector<1x128xf32>
    tpu.vector_store %arg10[%c0_23, %c0_24], %29 {strides = array<i32>} : memref<1x128xf32, #tpu.memory_space<vmem>>, vector<1x128xf32>,
    return
  }
  func.func @transform_0(%arg0: i32) -> (i32, i32) {
    %c0_i32 = arith.constant 0 : i32
    %c0_i32_0 = arith.constant 0 : i32
    return %c0_i32, %arg0 : i32, i32
  }
  func.func @transform_1(%arg0: i32) -> (i32, i32) {
    %c0_i32 = arith.constant 0 : i32
    %c0_i32_0 = arith.constant 0 : i32
    %c0_i32_1 = arith.constant 0 : i32
    return %c0_i32, %c0_i32_0 : i32, i32
  }
  func.func @transform_2(%arg0: i32) -> (i32, i32) {
    %c0_i32 = arith.constant 0 : i32
    %c0_i32_0 = arith.constant 0 : i32
    %c0_i32_1 = arith.constant 0 : i32
    return %c0_i32, %c0_i32_0 : i32, i32
  }
  func.func @transform_3(%arg0: i32) -> (i32, i32) {
    %c0_i32 = arith.constant 0 : i32
    %c0_i32_0 = arith.constant 0 : i32
    %c0_i32_1 = arith.constant 0 : i32
    return %c0_i32, %c0_i32_0 : i32, i32
  }
  func.func @transform_4(%arg0: i32) -> (i32, i32) {
    %c0_i32 = arith.constant 0 : i32
    %c0_i32_0 = arith.constant 0 : i32
    %c0_i32_1 = arith.constant 0 : i32
    return %c0_i32, %c0_i32_0 : i32, i32
  }
  func.func @transform_5(%arg0: i32) -> (i32, i32) {
    %c0_i32 = arith.constant 0 : i32
    %c0_i32_0 = arith.constant 0 : i32
    %c0_i32_1 = arith.constant 0 : i32
    return %c0_i32, %c0_i32_0 : i32, i32
  }
  func.func @transform_6(%arg0: i32) -> (i32, i32) {
    %c0_i32 = arith.constant 0 : i32
    %c0_i32_0 = arith.constant 0 : i32
    %c0_i32_1 = arith.constant 0 : i32
    return %c0_i32, %c0_i32_0 : i32, i32
  }
  func.func @transform_7(%arg0: i32) -> (i32, i32) {
    %c0_i32 = arith.constant 0 : i32
    %c0_i32_0 = arith.constant 0 : i32
    %c0_i32_1 = arith.constant 0 : i32
    return %c0_i32, %c0_i32_0 : i32, i32
  }
  func.func @transform_8(%arg0: i32) -> (i32, i32) {
    %c0_i32 = arith.constant 0 : i32
    %c0_i32_0 = arith.constant 0 : i32
    %c0_i32_1 = arith.constant 0 : i32
    return %c0_i32, %c0_i32_0 : i32, i32
  }
  func.func @transform_9(%arg0: i32) -> (i32, i32) {
    %c0_i32 = arith.constant 0 : i32
    %c0_i32_0 = arith.constant 0 : i32
    return %c0_i32, %arg0 : i32, i32
  }
}

</mosaic_0001>

<llo_original>
// kernel: mlp_forward.1
$region0: #{mlp_forward.1}
  #allocation0 [shape = 'u32[]', space=smem, size = 0x4, offset = 0x4, fixed_abs, tag = 'smem constant byte address 0x4 - core index']
  #allocation1 [shape = 'u32[72,128]{1,0:T(1,128)}', space=vmem, size = 0x9000, scoped, tag = 'internal scratch']
  #allocation2 [shape = 'f32[1,1]{1,0:T(1,128)S(1)}', space=vmem, size = 0x200, scoped, tag = 'scoped memory for mlp_forward.1']
  %s0 = inlined_call_operand.vmem [shape: f32[8,128], index: 0, kind: input, shape index: {}]
  %s1 = inlined_call_operand.vmem [shape: f32[64,8], index: 1, kind: input, shape index: {}]
  %s2 = inlined_call_operand.vmem [shape: f32[64,1], index: 2, kind: input, shape index: {}]
  %s3 = inlined_call_operand.vmem [shape: f32[32,64], index: 3, kind: input, shape index: {}]
  %s4 = inlined_call_operand.vmem [shape: f32[32,1], index: 4, kind: input, shape index: {}]
  %s5 = inlined_call_operand.vmem [shape: f32[16,32], index: 5, kind: input, shape index: {}]
  %s6 = inlined_call_operand.vmem [shape: f32[16,1], index: 6, kind: input, shape index: {}]
  %s7 = inlined_call_operand.vmem [shape: f32[16,1], index: 7, kind: input, shape index: {}]
  %s8 = inlined_call_operand.<no memory space> [shape: f32[1,1], index: 8, kind: input, shape index: {}]
  %s9 = inlined_call_operand.vmem [shape: f32[1,128], index: 9, kind: output, shape index: {}]
  %s10 = sld [smem:[#allocation0]]
  $region46: #{mlp_forward.1} parent=0
    _
  %s12 = ssub.s32 1, %s10
  %s13 = scalar_select 0, %s12, %s10
  %v14 = vstv %s8
  %15 = vst [vmem:[#allocation2] sm:$0x1] %v14
  // Predicated region
  $region2: #{mlp_forward.1} parent=0 // pred_check
    _
  $region3: #{mlp_forward.1} parent=0 // pred_check_branch
    %17 = sbr.rel (0) target = $region5
  $region4: #{mlp_forward.1} parent=0 // pred_region
    _
  $region5: #{mlp_forward.1} parent=0 // pred_fallthru
    _
  // Predicated region
  $region6: #{mlp_forward.1} parent=0 // pred_check
    _
  $region7: #{mlp_forward.1} parent=0 // pred_check_branch
    %19 = sbr.rel (0) target = $region9
  $region8: #{mlp_forward.1} parent=0 // pred_region
    _
  $region9: #{mlp_forward.1} parent=0 // pred_fallthru
    _
  // Predicated region
  $region10: #{mlp_forward.1} parent=0 // pred_check
    _
  $region11: #{mlp_forward.1} parent=0 // pred_check_branch
    %21 = sbr.rel (0) target = $region13
  $region12: #{mlp_forward.1} parent=0 // pred_region
    _
  $region13: #{mlp_forward.1} parent=0 // pred_fallthru
    _
  // Predicated region
  $region14: #{mlp_forward.1} parent=0 // pred_check
    _
  $region15: #{mlp_forward.1} parent=0 // pred_check_branch
    %23 = sbr.rel (0) target = $region17
  $region16: #{mlp_forward.1} parent=0 // pred_region
    _
  $region17: #{mlp_forward.1} parent=0 // pred_fallthru
    _
  // Predicated region
  $region18: #{mlp_forward.1} parent=0 // pred_check
    _
  $region19: #{mlp_forward.1} parent=0 // pred_check_branch
    %25 = sbr.rel (0) target = $region21
  $region20: #{mlp_forward.1} parent=0 // pred_region
    _
  $region21: #{mlp_forward.1} parent=0 // pred_fallthru
    _
  // Predicated region
  $region22: #{mlp_forward.1} parent=0 // pred_check
    _
  $region23: #{mlp_forward.1} parent=0 // pred_check_branch
    %27 = sbr.rel (0) target = $region25
  $region24: #{mlp_forward.1} parent=0 // pred_region
    _
  $region25: #{mlp_forward.1} parent=0 // pred_fallthru
    _
  // Predicated region
  $region26: #{mlp_forward.1} parent=0 // pred_check
    _
  $region27: #{mlp_forward.1} parent=0 // pred_check_branch
    %29 = sbr.rel (0) target = $region29
  $region28: #{mlp_forward.1} parent=0 // pred_region
    _
  $region29: #{mlp_forward.1} parent=0 // pred_fallthru
    _
  // Predicated region
  $region30: #{mlp_forward.1} parent=0 // pred_check
    _
  $region31: #{mlp_forward.1} parent=0 // pred_check_branch
    %31 = sbr.rel (0) target = $region33
  $region32: #{mlp_forward.1} parent=0 // pred_region
    _
  $region33: #{mlp_forward.1} parent=0 // pred_fallthru
    _
  // Predicated region
  $region34: #{mlp_forward.1} parent=0 // pred_check
    _
  $region35: #{mlp_forward.1} parent=0 // pred_check_branch
    %33 = sbr.rel (0) target = $region37
  $region36: #{mlp_forward.1} parent=0 // pred_region
    _
  $region37: #{mlp_forward.1} parent=0 // pred_fallthru
    _
  %v34 = vld [vmem:[%s0] sm:$0xff]
  %v35 = vld [vmem:[%s1] sm:$0xff]
  %v36 = vld [vmem:[%s1 + $0x8] sm:$0xff]
  %v37 = vld [vmem:[%s1 + $0x10] sm:$0xff]
  %v38 = vld [vmem:[%s1 + $0x18] sm:$0xff]
  %v39 = vld [vmem:[%s1 + $0x20] sm:$0xff]
  %v40 = vld [vmem:[%s1 + $0x28] sm:$0xff]
  %v41 = vld [vmem:[%s1 + $0x30] sm:$0xff]
  %v42 = vld [vmem:[%s1 + $0x38] sm:$0xff]
  %v43 = vld [vmem:[%s2] sm:$0xff]
  %v44 = vld [vmem:[%s2 + $0x8] sm:$0xff]
  %v45 = vld [vmem:[%s2 + $0x10] sm:$0xff]
  %v46 = vld [vmem:[%s2 + $0x18] sm:$0xff]
  %v47 = vld [vmem:[%s2 + $0x20] sm:$0xff]
  %v48 = vld [vmem:[%s2 + $0x28] sm:$0xff]
  %v49 = vld [vmem:[%s2 + $0x30] sm:$0xff]
  %v50 = vld [vmem:[%s2 + $0x38] sm:$0xff]
  %52 = vset.pattern.permute.xlu0 0
  %53 = vperm.xlu0 %52, %v43
  %v54 = vpop.permute.xlu0 %53
  %57 = vset.pattern.permute.xlu0 0
  %58 = vperm.xlu0 %57, %v44
  %v59 = vpop.permute.xlu0 %58
  %62 = vset.pattern.permute.xlu0 0
  %63 = vperm.xlu0 %62, %v45
  %v64 = vpop.permute.xlu0 %63
  %67 = vset.pattern.permute.xlu0 0
  %68 = vperm.xlu0 %67, %v46
  %v69 = vpop.permute.xlu0 %68
  %72 = vset.pattern.permute.xlu0 0
  %73 = vperm.xlu0 %72, %v47
  %v74 = vpop.permute.xlu0 %73
  %77 = vset.pattern.permute.xlu0 0
  %78 = vperm.xlu0 %77, %v48
  %v79 = vpop.permute.xlu0 %78
  %82 = vset.pattern.permute.xlu0 0
  %83 = vperm.xlu0 %82, %v49
  %v84 = vpop.permute.xlu0 %83
  %87 = vset.pattern.permute.xlu0 0
  %88 = vperm.xlu0 %87, %v50
  %v89 = vpop.permute.xlu0 %88
  %vm91 = vcmask 64512
  %v93 = vsel %vm91, %v35, 0
  %v96 = vsel %vm91, %v36, 0
  %v99 = vsel %vm91, %v37, 0
  %v102 = vsel %vm91, %v38, 0
  %v105 = vsel %vm91, %v39, 0
  %v108 = vsel %vm91, %v40, 0
  %v111 = vsel %vm91, %v41, 0
  %v114 = vsel %vm91, %v42, 0
  %116 = vmatpush.msra.mxu0 0.0
  %117 = vmatpush.msra.mxu0 0.0
  %118 = vmatpush.msra.mxu0 0.0
  %119 = vmatpush.msra.mxu0 0.0
  %120 = vmatpush.msra.mxu0 0.0
  %121 = vmatpush.msra.mxu0 0.0
  %122 = vmatpush.msra.mxu0 0.0
  %123 = vmatpush.msra.mxu0 0.0
  %124 = vmatpush.msra.mxu0 0.0
  %125 = vmatpush.msra.mxu0 0.0
  %126 = vmatpush.msra.mxu0 0.0
  %127 = vmatpush.msra.mxu0 0.0
  %128 = vmatpush.msra.mxu0 0.0
  %129 = vmatpush.msra.mxu0 0.0
  %130 = vmatpush.msra.mxu0 0.0
  %v131 = vand.u32 %v34, 4294901760
  %132 = vmatpush.msra.mxu0 %v131
  %v133 = vand.u32 %v93, 4294901760
  %v134 = vsub.f32 %v93, %v133
  %v135 = vand.u32 %v134, 4294901760
  %v136 = vsub.f32 %v134, %v135
  %v137 = vand.u32 %v136, 4294901760
  %138 = vmatmul.f32.gmra.mxu0 %v137
  %v139 = vpop.f32.mrf.mxu0
  %v140 = vadd.f32 %v54, %v139
  %v141 = vand.u32 %v96, 4294901760
  %v142 = vsub.f32 %v96, %v141
  %v143 = vand.u32 %v142, 4294901760
  %v144 = vsub.f32 %v142, %v143
  %v145 = vand.u32 %v144, 4294901760
  %146 = vmatmul.f32.gmra.mxu0 %v145
  %v147 = vpop.f32.mrf.mxu0
  %v148 = vadd.f32 %v59, %v147
  %v149 = vand.u32 %v99, 4294901760
  %v150 = vsub.f32 %v99, %v149
  %v151 = vand.u32 %v150, 4294901760
  %v152 = vsub.f32 %v150, %v151
  %v153 = vand.u32 %v152, 4294901760
  %154 = vmatmul.f32.gmra.mxu0 %v153
  %v155 = vpop.f32.mrf.mxu0
  %v156 = vadd.f32 %v64, %v155
  %v157 = vand.u32 %v102, 4294901760
  %v158 = vsub.f32 %v102, %v157
  %v159 = vand.u32 %v158, 4294901760
  %v160 = vsub.f32 %v158, %v159
  %v161 = vand.u32 %v160, 4294901760
  %162 = vmatmul.f32.gmra.mxu0 %v161
  %v163 = vpop.f32.mrf.mxu0
  %v164 = vadd.f32 %v69, %v163
  %v165 = vand.u32 %v105, 4294901760
  %v166 = vsub.f32 %v105, %v165
  %v167 = vand.u32 %v166, 4294901760
  %v168 = vsub.f32 %v166, %v167
  %v169 = vand.u32 %v168, 4294901760
  %170 = vmatmul.f32.gmra.mxu0 %v169
  %v171 = vpop.f32.mrf.mxu0
  %v172 = vadd.f32 %v74, %v171
  %v173 = vand.u32 %v108, 4294901760
  %v174 = vsub.f32 %v108, %v173
  %v175 = vand.u32 %v174, 4294901760
  %v176 = vsub.f32 %v174, %v175
  %v177 = vand.u32 %v176, 4294901760
  %178 = vmatmul.f32.gmra.mxu0 %v177
  %v179 = vpop.f32.mrf.mxu0
  %v180 = vadd.f32 %v79, %v179
  %v181 = vand.u32 %v111, 4294901760
  %v182 = vsub.f32 %v111, %v181
  %v183 = vand.u32 %v182, 4294901760
  %v184 = vsub.f32 %v182, %v183
  %v185 = vand.u32 %v184, 4294901760
  %186 = vmatmul.f32.gmra.mxu0 %v185
  %v187 = vpop.f32.mrf.mxu0
  %v188 = vadd.f32 %v84, %v187
  %v189 = vand.u32 %v114, 4294901760
  %v190 = vsub.f32 %v114, %v189
  %v191 = vand.u32 %v190, 4294901760
  %v192 = vsub.f32 %v190, %v191
  %v193 = vand.u32 %v192, 4294901760
  %194 = vmatmul.f32.gmra.mxu0 %v193
  %v195 = vpop.f32.mrf.mxu0
  %v196 = vadd.f32 %v89, %v195
  %197 = vdwg.mxu0
  %198 = vmatpush.msra.mxu0 0.0
  %199 = vmatpush.msra.mxu0 0.0
  %200 = vmatpush.msra.mxu0 0.0
  %201 = vmatpush.msra.mxu0 0.0
  %202 = vmatpush.msra.mxu0 0.0
  %203 = vmatpush.msra.mxu0 0.0
  %204 = vmatpush.msra.mxu0 0.0
  %205 = vmatpush.msra.mxu0 0.0
  %206 = vmatpush.msra.mxu0 0.0
  %207 = vmatpush.msra.mxu0 0.0
  %208 = vmatpush.msra.mxu0 0.0
  %209 = vmatpush.msra.mxu0 0.0
  %210 = vmatpush.msra.mxu0 0.0
  %211 = vmatpush.msra.mxu0 0.0
  %212 = vmatpush.msra.mxu0 0.0
  %v213 = vand.u32 %v34, 4294901760
  %v214 = vsub.f32 %v34, %v213
  %v215 = vand.u32 %v214, 4294901760
  %v216 = vsub.f32 %v214, %v215
  %v217 = vand.u32 %v216, 4294901760
  %218 = vmatpush.msra.mxu0 %v217
  %v219 = vand.u32 %v93, 4294901760
  %220 = vmatmul.f32.gmra.mxu0 %v219
  %v221 = vpop.f32.mrf.mxu0
  %v222 = vadd.f32 %v140, %v221
  %v223 = vand.u32 %v96, 4294901760
  %224 = vmatmul.f32.gmra.mxu0 %v223
  %v225 = vpop.f32.mrf.mxu0
  %v226 = vadd.f32 %v148, %v225
  %v227 = vand.u32 %v99, 4294901760
  %228 = vmatmul.f32.gmra.mxu0 %v227
  %v229 = vpop.f32.mrf.mxu0
  %v230 = vadd.f32 %v156, %v229
  %v231 = vand.u32 %v102, 4294901760
  %232 = vmatmul.f32.gmra.mxu0 %v231
  %v233 = vpop.f32.mrf.mxu0
  %v234 = vadd.f32 %v164, %v233
  %v235 = vand.u32 %v105, 4294901760
  %236 = vmatmul.f32.gmra.mxu0 %v235
  %v237 = vpop.f32.mrf.mxu0
  %v238 = vadd.f32 %v172, %v237
  %v239 = vand.u32 %v108, 4294901760
  %240 = vmatmul.f32.gmra.mxu0 %v239
  %v241 = vpop.f32.mrf.mxu0
  %v242 = vadd.f32 %v180, %v241
  %v243 = vand.u32 %v111, 4294901760
  %244 = vmatmul.f32.gmra.mxu0 %v243
  %v245 = vpop.f32.mrf.mxu0
  %v246 = vadd.f32 %v188, %v245
  %v247 = vand.u32 %v114, 4294901760
  %248 = vmatmul.f32.gmra.mxu0 %v247
  %v249 = vpop.f32.mrf.mxu0
  %v250 = vadd.f32 %v196, %v249
  %251 = vdwg.mxu0
  %252 = vmatpush.msra.mxu0 0.0
  %253 = vmatpush.msra.mxu0 0.0
  %254 = vmatpush.msra.mxu0 0.0
  %255 = vmatpush.msra.mxu0 0.0
  %256 = vmatpush.msra.mxu0 0.0
  %257 = vmatpush.msra.mxu0 0.0
  %258 = vmatpush.msra.mxu0 0.0
  %259 = vmatpush.msra.mxu0 0.0
  %260 = vmatpush.msra.mxu0 0.0
  %261 = vmatpush.msra.mxu0 0.0
  %262 = vmatpush.msra.mxu0 0.0
  %263 = vmatpush.msra.mxu0 0.0
  %264 = vmatpush.msra.mxu0 0.0
  %265 = vmatpush.msra.mxu0 0.0
  %266 = vmatpush.msra.mxu0 0.0
  %v267 = vand.u32 %v34, 4294901760
  %v268 = vsub.f32 %v34, %v267
  %269 = vmatpush.msra.mxu0 %v268
  %v270 = vand.u32 %v93, 4294901760
  %v271 = vsub.f32 %v93, %v270
  %272 = vmatmul.f32.gmra.mxu0 %v271
  %v273 = vpop.f32.mrf.mxu0
  %v274 = vadd.f32 %v222, %v273
  %v275 = vand.u32 %v96, 4294901760
  %v276 = vsub.f32 %v96, %v275
  %277 = vmatmul.f32.gmra.mxu0 %v276
  %v278 = vpop.f32.mrf.mxu0
  %v279 = vadd.f32 %v226, %v278
  %v280 = vand.u32 %v99, 4294901760
  %v281 = vsub.f32 %v99, %v280
  %282 = vmatmul.f32.gmra.mxu0 %v281
  %v283 = vpop.f32.mrf.mxu0
  %v284 = vadd.f32 %v230, %v283
  %v285 = vand.u32 %v102, 4294901760
  %v286 = vsub.f32 %v102, %v285
  %287 = vmatmul.f32.gmra.mxu0 %v286
  %v288 = vpop.f32.mrf.mxu0
  %v289 = vadd.f32 %v234, %v288
  %v290 = vand.u32 %v105, 4294901760
  %v291 = vsub.f32 %v105, %v290
  %292 = vmatmul.f32.gmra.mxu0 %v291
  %v293 = vpop.f32.mrf.mxu0
  %v294 = vadd.f32 %v238, %v293
  %v295 = vand.u32 %v108, 4294901760
  %v296 = vsub.f32 %v108, %v295
  %297 = vmatmul.f32.gmra.mxu0 %v296
  %v298 = vpop.f32.mrf.mxu0
  %v299 = vadd.f32 %v242, %v298
  %v300 = vand.u32 %v111, 4294901760
  %v301 = vsub.f32 %v111, %v300
  %302 = vmatmul.f32.gmra.mxu0 %v301
  %v303 = vpop.f32.mrf.mxu0
  %v304 = vadd.f32 %v246, %v303
  %v305 = vand.u32 %v114, 4294901760
  %v306 = vsub.f32 %v114, %v305
  %307 = vmatmul.f32.gmra.mxu0 %v306
  %v308 = vpop.f32.mrf.mxu0
  %v309 = vadd.f32 %v250, %v308
  %310 = vdwg.mxu0
  %311 = vmatpush.msra.mxu0 0.0
  %312 = vmatpush.msra.mxu0 0.0
  %313 = vmatpush.msra.mxu0 0.0
  %314 = vmatpush.msra.mxu0 0.0
  %315 = vmatpush.msra.mxu0 0.0
  %316 = vmatpush.msra.mxu0 0.0
  %317 = vmatpush.msra.mxu0 0.0
  %318 = vmatpush.msra.mxu0 0.0
  %319 = vmatpush.msra.mxu0 0.0
  %320 = vmatpush.msra.mxu0 0.0
  %321 = vmatpush.msra.mxu0 0.0
  %322 = vmatpush.msra.mxu0 0.0
  %323 = vmatpush.msra.mxu0 0.0
  %324 = vmatpush.msra.mxu0 0.0
  %325 = vmatpush.msra.mxu0 0.0
  %v326 = vand.u32 %v34, 4294901760
  %327 = vmatpush.msra.mxu0 %v326
  %v328 = vand.u32 %v93, 4294901760
  %v329 = vsub.f32 %v93, %v328
  %v330 = vand.u32 %v329, 4294901760
  %331 = vmatmul.f32.gmra.mxu0 %v330
  %v332 = vpop.f32.mrf.mxu0
  %v333 = vadd.f32 %v274, %v332
  %v334 = vand.u32 %v96, 4294901760
  %v335 = vsub.f32 %v96, %v334
  %v336 = vand.u32 %v335, 4294901760
  %337 = vmatmul.f32.gmra.mxu0 %v336
  %v338 = vpop.f32.mrf.mxu0
  %v339 = vadd.f32 %v279, %v338
  %v340 = vand.u32 %v99, 4294901760
  %v341 = vsub.f32 %v99, %v340
  %v342 = vand.u32 %v341, 4294901760
  %343 = vmatmul.f32.gmra.mxu0 %v342
  %v344 = vpop.f32.mrf.mxu0
  %v345 = vadd.f32 %v284, %v344
  %v346 = vand.u32 %v102, 4294901760
  %v347 = vsub.f32 %v102, %v346
  %v348 = vand.u32 %v347, 4294901760
  %349 = vmatmul.f32.gmra.mxu0 %v348
  %v350 = vpop.f32.mrf.mxu0
  %v351 = vadd.f32 %v289, %v350
  %v352 = vand.u32 %v105, 4294901760
  %v353 = vsub.f32 %v105, %v352
  %v354 = vand.u32 %v353, 4294901760
  %355 = vmatmul.f32.gmra.mxu0 %v354
  %v356 = vpop.f32.mrf.mxu0
  %v357 = vadd.f32 %v294, %v356
  %v358 = vand.u32 %v108, 4294901760
  %v359 = vsub.f32 %v108, %v358
  %v360 = vand.u32 %v359, 4294901760
  %361 = vmatmul.f32.gmra.mxu0 %v360
  %v362 = vpop.f32.mrf.mxu0
  %v363 = vadd.f32 %v299, %v362
  %v364 = vand.u32 %v111, 4294901760
  %v365 = vsub.f32 %v111, %v364
  %v366 = vand.u32 %v365, 4294901760
  %367 = vmatmul.f32.gmra.mxu0 %v366
  %v368 = vpop.f32.mrf.mxu0
  %v369 = vadd.f32 %v304, %v368
  %v370 = vand.u32 %v114, 4294901760
  %v371 = vsub.f32 %v114, %v370
  %v372 = vand.u32 %v371, 4294901760
  %373 = vmatmul.f32.gmra.mxu0 %v372
  %v374 = vpop.f32.mrf.mxu0
  %v375 = vadd.f32 %v309, %v374
  %376 = vdwg.mxu0
  %377 = vmatpush.msra.mxu0 0.0
  %378 = vmatpush.msra.mxu0 0.0
  %379 = vmatpush.msra.mxu0 0.0
  %380 = vmatpush.msra.mxu0 0.0
  %381 = vmatpush.msra.mxu0 0.0
  %382 = vmatpush.msra.mxu0 0.0
  %383 = vmatpush.msra.mxu0 0.0
  %384 = vmatpush.msra.mxu0 0.0
  %385 = vmatpush.msra.mxu0 0.0
  %386 = vmatpush.msra.mxu0 0.0
  %387 = vmatpush.msra.mxu0 0.0
  %388 = vmatpush.msra.mxu0 0.0
  %389 = vmatpush.msra.mxu0 0.0
  %390 = vmatpush.msra.mxu0 0.0
  %391 = vmatpush.msra.mxu0 0.0
  %v392 = vand.u32 %v34, 4294901760
  %v393 = vsub.f32 %v34, %v392
  %v394 = vand.u32 %v393, 4294901760
  %395 = vmatpush.msra.mxu0 %v394
  %v396 = vand.u32 %v93, 4294901760
  %397 = vmatmul.f32.gmra.mxu0 %v396
  %v398 = vpop.f32.mrf.mxu0
  %v399 = vadd.f32 %v333, %v398
  %v400 = vand.u32 %v96, 4294901760
  %401 = vmatmul.f32.gmra.mxu0 %v400
  %v402 = vpop.f32.mrf.mxu0
  %v403 = vadd.f32 %v339, %v402
  %v404 = vand.u32 %v99, 4294901760
  %405 = vmatmul.f32.gmra.mxu0 %v404
  %v406 = vpop.f32.mrf.mxu0
  %v407 = vadd.f32 %v345, %v406
  %v408 = vand.u32 %v102, 4294901760
  %409 = vmatmul.f32.gmra.mxu0 %v408
  %v410 = vpop.f32.mrf.mxu0
  %v411 = vadd.f32 %v351, %v410
  %v412 = vand.u32 %v105, 4294901760
  %413 = vmatmul.f32.gmra.mxu0 %v412
  %v414 = vpop.f32.mrf.mxu0
  %v415 = vadd.f32 %v357, %v414
  %v416 = vand.u32 %v108, 4294901760
  %417 = vmatmul.f32.gmra.mxu0 %v416
  %v418 = vpop.f32.mrf.mxu0
  %v419 = vadd.f32 %v363, %v418
  %v420 = vand.u32 %v111, 4294901760
  %421 = vmatmul.f32.gmra.mxu0 %v420
  %v422 = vpop.f32.mrf.mxu0
  %v423 = vadd.f32 %v369, %v422
  %v424 = vand.u32 %v114, 4294901760
  %425 = vmatmul.f32.gmra.mxu0 %v424
  %v426 = vpop.f32.mrf.mxu0
  %v427 = vadd.f32 %v375, %v426
  %428 = vdwg.mxu0
  %429 = vmatpush.msra.mxu0 0.0
  %430 = vmatpush.msra.mxu0 0.0
  %431 = vmatpush.msra.mxu0 0.0
  %432 = vmatpush.msra.mxu0 0.0
  %433 = vmatpush.msra.mxu0 0.0
  %434 = vmatpush.msra.mxu0 0.0
  %435 = vmatpush.msra.mxu0 0.0
  %436 = vmatpush.msra.mxu0 0.0
  %437 = vmatpush.msra.mxu0 0.0
  %438 = vmatpush.msra.mxu0 0.0
  %439 = vmatpush.msra.mxu0 0.0
  %440 = vmatpush.msra.mxu0 0.0
  %441 = vmatpush.msra.mxu0 0.0
  %442 = vmatpush.msra.mxu0 0.0
  %443 = vmatpush.msra.mxu0 0.0
  %v444 = vand.u32 %v34, 4294901760
  %445 = vmatpush.msra.mxu0 %v444
  %v446 = vand.u32 %v93, 4294901760
  %447 = vmatmul.f32.gmra.mxu0 %v446
  %v448 = vpop.f32.mrf.mxu0
  %v449 = vadd.f32 %v399, %v448
  %v450 = vand.u32 %v96, 4294901760
  %451 = vmatmul.f32.gmra.mxu0 %v450
  %v452 = vpop.f32.mrf.mxu0
  %v453 = vadd.f32 %v403, %v452
  %v454 = vand.u32 %v99, 4294901760
  %455 = vmatmul.f32.gmra.mxu0 %v454
  %v456 = vpop.f32.mrf.mxu0
  %v457 = vadd.f32 %v407, %v456
  %v458 = vand.u32 %v102, 4294901760
  %459 = vmatmul.f32.gmra.mxu0 %v458
  %v460 = vpop.f32.mrf.mxu0
  %v461 = vadd.f32 %v411, %v460
  %v462 = vand.u32 %v105, 4294901760
  %463 = vmatmul.f32.gmra.mxu0 %v462
  %v464 = vpop.f32.mrf.mxu0
  %v465 = vadd.f32 %v415, %v464
  %v466 = vand.u32 %v108, 4294901760
  %467 = vmatmul.f32.gmra.mxu0 %v466
  %v468 = vpop.f32.mrf.mxu0
  %v469 = vadd.f32 %v419, %v468
  %v470 = vand.u32 %v111, 4294901760
  %471 = vmatmul.f32.gmra.mxu0 %v470
  %v472 = vpop.f32.mrf.mxu0
  %v473 = vadd.f32 %v423, %v472
  %v474 = vand.u32 %v114, 4294901760
  %475 = vmatmul.f32.gmra.mxu0 %v474
  %v476 = vpop.f32.mrf.mxu0
  %v477 = vadd.f32 %v427, %v476
  %478 = vdwg.mxu0
  %v479 = vmax.f32 %v449, 0.0
  %v480 = vmax.f32 %v453, 0.0
  %v481 = vmax.f32 %v457, 0.0
  %v482 = vmax.f32 %v461, 0.0
  %v483 = vmax.f32 %v465, 0.0
  %v484 = vmax.f32 %v469, 0.0
  %v485 = vmax.f32 %v473, 0.0
  %v486 = vmax.f32 %v477, 0.0
  %v487 = vld [vmem:[%s3] sm:$0xff]
  %v488 = vld [vmem:[%s3 + $0x8] sm:$0xff]
  %v489 = vld [vmem:[%s3 + $0x10] sm:$0xff]
  %v490 = vld [vmem:[%s3 + $0x18] sm:$0xff]
  %v491 = vld [vmem:[%s4] sm:$0xff]
  %v492 = vld [vmem:[%s4 + $0x8] sm:$0xff]
  %v493 = vld [vmem:[%s4 + $0x10] sm:$0xff]
  %v494 = vld [vmem:[%s4 + $0x18] sm:$0xff]
  %496 = vset.pattern.permute.xlu0 0
  %497 = vperm.xlu0 %496, %v491
  %v498 = vpop.permute.xlu0 %497
  %501 = vset.pattern.permute.xlu0 0
  %502 = vperm.xlu0 %501, %v492
  %v503 = vpop.permute.xlu0 %502
  %506 = vset.pattern.permute.xlu0 0
  %507 = vperm.xlu0 %506, %v493
  %v508 = vpop.permute.xlu0 %507
  %511 = vset.pattern.permute.xlu0 0
  %512 = vperm.xlu0 %511, %v494
  %v513 = vpop.permute.xlu0 %512
  %vm515 = vcmask 523264
  %v517 = vsel %vm515, %v487, 0
  %v520 = vsel %vm515, %v488, 0
  %v523 = vsel %vm515, %v489, 0
  %v526 = vsel %vm515, %v490, 0
  %528 = vmatpush.msra.mxu0 0.0
  %529 = vmatpush.msra.mxu0 0.0
  %530 = vmatpush.msra.mxu0 0.0
  %531 = vmatpush.msra.mxu0 0.0
  %532 = vmatpush.msra.mxu0 0.0
  %533 = vmatpush.msra.mxu0 0.0
  %534 = vmatpush.msra.mxu0 0.0
  %535 = vmatpush.msra.mxu0 0.0
  %v536 = vand.u32 %v486, 4294901760
  %537 = vmatpush.msra.mxu0 %v536
  %v538 = vand.u32 %v485, 4294901760
  %539 = vmatpush.msra.mxu0 %v538
  %v540 = vand.u32 %v484, 4294901760
  %541 = vmatpush.msra.mxu0 %v540
  %v542 = vand.u32 %v483, 4294901760
  %543 = vmatpush.msra.mxu0 %v542
  %v544 = vand.u32 %v482, 4294901760
  %545 = vmatpush.msra.mxu0 %v544
  %v546 = vand.u32 %v481, 4294901760
  %547 = vmatpush.msra.mxu0 %v546
  %v548 = vand.u32 %v480, 4294901760
  %549 = vmatpush.msra.mxu0 %v548
  %v550 = vand.u32 %v479, 4294901760
  %551 = vmatpush.msra.mxu0 %v550
  %v552 = vand.u32 %v517, 4294901760
  %v553 = vsub.f32 %v517, %v552
  %v554 = vand.u32 %v553, 4294901760
  %v555 = vsub.f32 %v553, %v554
  %v556 = vand.u32 %v555, 4294901760
  %557 = vmatmul.f32.gmra.mxu0 %v556
  %v558 = vpop.f32.mrf.mxu0
  %v559 = vadd.f32 %v498, %v558
  %v560 = vand.u32 %v520, 4294901760
  %v561 = vsub.f32 %v520, %v560
  %v562 = vand.u32 %v561, 4294901760
  %v563 = vsub.f32 %v561, %v562
  %v564 = vand.u32 %v563, 4294901760
  %565 = vmatmul.f32.gmra.mxu0 %v564
  %v566 = vpop.f32.mrf.mxu0
  %v567 = vadd.f32 %v503, %v566
  %v568 = vand.u32 %v523, 4294901760
  %v569 = vsub.f32 %v523, %v568
  %v570 = vand.u32 %v569, 4294901760
  %v571 = vsub.f32 %v569, %v570
  %v572 = vand.u32 %v571, 4294901760
  %573 = vmatmul.f32.gmra.mxu0 %v572
  %v574 = vpop.f32.mrf.mxu0
  %v575 = vadd.f32 %v508, %v574
  %v576 = vand.u32 %v526, 4294901760
  %v577 = vsub.f32 %v526, %v576
  %v578 = vand.u32 %v577, 4294901760
  %v579 = vsub.f32 %v577, %v578
  %v580 = vand.u32 %v579, 4294901760
  %581 = vmatmul.f32.gmra.mxu0 %v580
  %v582 = vpop.f32.mrf.mxu0
  %v583 = vadd.f32 %v513, %v582
  %584 = vdwg.mxu0
  %585 = vmatpush.msra.mxu0 0.0
  %586 = vmatpush.msra.mxu0 0.0
  %587 = vmatpush.msra.mxu0 0.0
  %588 = vmatpush.msra.mxu0 0.0
  %589 = vmatpush.msra.mxu0 0.0
  %590 = vmatpush.msra.mxu0 0.0
  %591 = vmatpush.msra.mxu0 0.0
  %592 = vmatpush.msra.mxu0 0.0
  %v593 = vand.u32 %v486, 4294901760
  %v594 = vsub.f32 %v486, %v593
  %v595 = vand.u32 %v594, 4294901760
  %v596 = vsub.f32 %v594, %v595
  %v597 = vand.u32 %v596, 4294901760
  %598 = vmatpush.msra.mxu0 %v597
  %v599 = vand.u32 %v485, 4294901760
  %v600 = vsub.f32 %v485, %v599
  %v601 = vand.u32 %v600, 4294901760
  %v602 = vsub.f32 %v600, %v601
  %v603 = vand.u32 %v602, 4294901760
  %604 = vmatpush.msra.mxu0 %v603
  %v605 = vand.u32 %v484, 4294901760
  %v606 = vsub.f32 %v484, %v605
  %v607 = vand.u32 %v606, 4294901760
  %v608 = vsub.f32 %v606, %v607
  %v609 = vand.u32 %v608, 4294901760
  %610 = vmatpush.msra.mxu0 %v609
  %v611 = vand.u32 %v483, 4294901760
  %v612 = vsub.f32 %v483, %v611
  %v613 = vand.u32 %v612, 4294901760
  %v614 = vsub.f32 %v612, %v613
  %v615 = vand.u32 %v614, 4294901760
  %616 = vmatpush.msra.mxu0 %v615
  %v617 = vand.u32 %v482, 4294901760
  %v618 = vsub.f32 %v482, %v617
  %v619 = vand.u32 %v618, 4294901760
  %v620 = vsub.f32 %v618, %v619
  %v621 = vand.u32 %v620, 4294901760
  %622 = vmatpush.msra.mxu0 %v621
  %v623 = vand.u32 %v481, 4294901760
  %v624 = vsub.f32 %v481, %v623
  %v625 = vand.u32 %v624, 4294901760
  %v626 = vsub.f32 %v624, %v625
  %v627 = vand.u32 %v626, 4294901760
  %628 = vmatpush.msra.mxu0 %v627
  %v629 = vand.u32 %v480, 4294901760
  %v630 = vsub.f32 %v480, %v629
  %v631 = vand.u32 %v630, 4294901760
  %v632 = vsub.f32 %v630, %v631
  %v633 = vand.u32 %v632, 4294901760
  %634 = vmatpush.msra.mxu0 %v633
  %v635 = vand.u32 %v479, 4294901760
  %v636 = vsub.f32 %v479, %v635
  %v637 = vand.u32 %v636, 4294901760
  %v638 = vsub.f32 %v636, %v637
  %v639 = vand.u32 %v638, 4294901760
  %640 = vmatpush.msra.mxu0 %v639
  %v641 = vand.u32 %v517, 4294901760
  %642 = vmatmul.f32.gmra.mxu0 %v641
  %v643 = vpop.f32.mrf.mxu0
  %v644 = vadd.f32 %v559, %v643
  %v645 = vand.u32 %v520, 4294901760
  %646 = vmatmul.f32.gmra.mxu0 %v645
  %v647 = vpop.f32.mrf.mxu0
  %v648 = vadd.f32 %v567, %v647
  %v649 = vand.u32 %v523, 4294901760
  %650 = vmatmul.f32.gmra.mxu0 %v649
  %v651 = vpop.f32.mrf.mxu0
  %v652 = vadd.f32 %v575, %v651
  %v653 = vand.u32 %v526, 4294901760
  %654 = vmatmul.f32.gmra.mxu0 %v653
  %v655 = vpop.f32.mrf.mxu0
  %v656 = vadd.f32 %v583, %v655
  %657 = vdwg.mxu0
  %658 = vmatpush.msra.mxu0 0.0
  %659 = vmatpush.msra.mxu0 0.0
  %660 = vmatpush.msra.mxu0 0.0
  %661 = vmatpush.msra.mxu0 0.0
  %662 = vmatpush.msra.mxu0 0.0
  %663 = vmatpush.msra.mxu0 0.0
  %664 = vmatpush.msra.mxu0 0.0
  %665 = vmatpush.msra.mxu0 0.0
  %v666 = vand.u32 %v486, 4294901760
  %v667 = vsub.f32 %v486, %v666
  %668 = vmatpush.msra.mxu0 %v667
  %v669 = vand.u32 %v485, 4294901760
  %v670 = vsub.f32 %v485, %v669
  %671 = vmatpush.msra.mxu0 %v670
  %v672 = vand.u32 %v484, 4294901760
  %v673 = vsub.f32 %v484, %v672
  %674 = vmatpush.msra.mxu0 %v673
  %v675 = vand.u32 %v483, 4294901760
  %v676 = vsub.f32 %v483, %v675
  %677 = vmatpush.msra.mxu0 %v676
  %v678 = vand.u32 %v482, 4294901760
  %v679 = vsub.f32 %v482, %v678
  %680 = vmatpush.msra.mxu0 %v679
  %v681 = vand.u32 %v481, 4294901760
  %v682 = vsub.f32 %v481, %v681
  %683 = vmatpush.msra.mxu0 %v682
  %v684 = vand.u32 %v480, 4294901760
  %v685 = vsub.f32 %v480, %v684
  %686 = vmatpush.msra.mxu0 %v685
  %v687 = vand.u32 %v479, 4294901760
  %v688 = vsub.f32 %v479, %v687
  %689 = vmatpush.msra.mxu0 %v688
  %v690 = vand.u32 %v517, 4294901760
  %v691 = vsub.f32 %v517, %v690
  %692 = vmatmul.f32.gmra.mxu0 %v691
  %v693 = vpop.f32.mrf.mxu0
  %v694 = vadd.f32 %v644, %v693
  %v695 = vand.u32 %v520, 4294901760
  %v696 = vsub.f32 %v520, %v695
  %697 = vmatmul.f32.gmra.mxu0 %v696
  %v698 = vpop.f32.mrf.mxu0
  %v699 = vadd.f32 %v648, %v698
  %v700 = vand.u32 %v523, 4294901760
  %v701 = vsub.f32 %v523, %v700
  %702 = vmatmul.f32.gmra.mxu0 %v701
  %v703 = vpop.f32.mrf.mxu0
  %v704 = vadd.f32 %v652, %v703
  %v705 = vand.u32 %v526, 4294901760
  %v706 = vsub.f32 %v526, %v705
  %707 = vmatmul.f32.gmra.mxu0 %v706
  %v708 = vpop.f32.mrf.mxu0
  %v709 = vadd.f32 %v656, %v708
  %710 = vdwg.mxu0
  %711 = vmatpush.msra.mxu0 0.0
  %712 = vmatpush.msra.mxu0 0.0
  %713 = vmatpush.msra.mxu0 0.0
  %714 = vmatpush.msra.mxu0 0.0
  %715 = vmatpush.msra.mxu0 0.0
  %716 = vmatpush.msra.mxu0 0.0
  %717 = vmatpush.msra.mxu0 0.0
  %718 = vmatpush.msra.mxu0 0.0
  %v719 = vand.u32 %v486, 4294901760
  %720 = vmatpush.msra.mxu0 %v719
  %v721 = vand.u32 %v485, 4294901760
  %722 = vmatpush.msra.mxu0 %v721
  %v723 = vand.u32 %v484, 4294901760
  %724 = vmatpush.msra.mxu0 %v723
  %v725 = vand.u32 %v483, 4294901760
  %726 = vmatpush.msra.mxu0 %v725
  %v727 = vand.u32 %v482, 4294901760
  %728 = vmatpush.msra.mxu0 %v727
  %v729 = vand.u32 %v481, 4294901760
  %730 = vmatpush.msra.mxu0 %v729
  %v731 = vand.u32 %v480, 4294901760
  %732 = vmatpush.msra.mxu0 %v731
  %v733 = vand.u32 %v479, 4294901760
  %734 = vmatpush.msra.mxu0 %v733
  %v735 = vand.u32 %v517, 4294901760
  %v736 = vsub.f32 %v517, %v735
  %v737 = vand.u32 %v736, 4294901760
  %738 = vmatmul.f32.gmra.mxu0 %v737
  %v739 = vpop.f32.mrf.mxu0
  %v740 = vadd.f32 %v694, %v739
  %v741 = vand.u32 %v520, 4294901760
  %v742 = vsub.f32 %v520, %v741
  %v743 = vand.u32 %v742, 4294901760
  %744 = vmatmul.f32.gmra.mxu0 %v743
  %v745 = vpop.f32.mrf.mxu0
  %v746 = vadd.f32 %v699, %v745
  %v747 = vand.u32 %v523, 4294901760
  %v748 = vsub.f32 %v523, %v747
  %v749 = vand.u32 %v748, 4294901760
  %750 = vmatmul.f32.gmra.mxu0 %v749
  %v751 = vpop.f32.mrf.mxu0
  %v752 = vadd.f32 %v704, %v751
  %v753 = vand.u32 %v526, 4294901760
  %v754 = vsub.f32 %v526, %v753
  %v755 = vand.u32 %v754, 4294901760
  %756 = vmatmul.f32.gmra.mxu0 %v755
  %v757 = vpop.f32.mrf.mxu0
  %v758 = vadd.f32 %v709, %v757
  %759 = vdwg.mxu0
  %760 = vmatpush.msra.mxu0 0.0
  %761 = vmatpush.msra.mxu0 0.0
  %762 = vmatpush.msra.mxu0 0.0
  %763 = vmatpush.msra.mxu0 0.0
  %764 = vmatpush.msra.mxu0 0.0
  %765 = vmatpush.msra.mxu0 0.0
  %766 = vmatpush.msra.mxu0 0.0
  %767 = vmatpush.msra.mxu0 0.0
  %v768 = vand.u32 %v486, 4294901760
  %v769 = vsub.f32 %v486, %v768
  %v770 = vand.u32 %v769, 4294901760
  %771 = vmatpush.msra.mxu0 %v770
  %v772 = vand.u32 %v485, 4294901760
  %v773 = vsub.f32 %v485, %v772
  %v774 = vand.u32 %v773, 4294901760
  %775 = vmatpush.msra.mxu0 %v774
  %v776 = vand.u32 %v484, 4294901760
  %v777 = vsub.f32 %v484, %v776
  %v778 = vand.u32 %v777, 4294901760
  %779 = vmatpush.msra.mxu0 %v778
  %v780 = vand.u32 %v483, 4294901760
  %v781 = vsub.f32 %v483, %v780
  %v782 = vand.u32 %v781, 4294901760
  %783 = vmatpush.msra.mxu0 %v782
  %v784 = vand.u32 %v482, 4294901760
  %v785 = vsub.f32 %v482, %v784
  %v786 = vand.u32 %v785, 4294901760
  %787 = vmatpush.msra.mxu0 %v786
  %v788 = vand.u32 %v481, 4294901760
  %v789 = vsub.f32 %v481, %v788
  %v790 = vand.u32 %v789, 4294901760
  %791 = vmatpush.msra.mxu0 %v790
  %v792 = vand.u32 %v480, 4294901760
  %v793 = vsub.f32 %v480, %v792
  %v794 = vand.u32 %v793, 4294901760
  %795 = vmatpush.msra.mxu0 %v794
  %v796 = vand.u32 %v479, 4294901760
  %v797 = vsub.f32 %v479, %v796
  %v798 = vand.u32 %v797, 4294901760
  %799 = vmatpush.msra.mxu0 %v798
  %v800 = vand.u32 %v517, 4294901760
  %801 = vmatmul.f32.gmra.mxu0 %v800
  %v802 = vpop.f32.mrf.mxu0
  %v803 = vadd.f32 %v740, %v802
  %v804 = vand.u32 %v520, 4294901760
  %805 = vmatmul.f32.gmra.mxu0 %v804
  %v806 = vpop.f32.mrf.mxu0
  %v807 = vadd.f32 %v746, %v806
  %v808 = vand.u32 %v523, 4294901760
  %809 = vmatmul.f32.gmra.mxu0 %v808
  %v810 = vpop.f32.mrf.mxu0
  %v811 = vadd.f32 %v752, %v810
  %v812 = vand.u32 %v526, 4294901760
  %813 = vmatmul.f32.gmra.mxu0 %v812
  %v814 = vpop.f32.mrf.mxu0
  %v815 = vadd.f32 %v758, %v814
  %816 = vdwg.mxu0
  %817 = vmatpush.msra.mxu0 0.0
  %818 = vmatpush.msra.mxu0 0.0
  %819 = vmatpush.msra.mxu0 0.0
  %820 = vmatpush.msra.mxu0 0.0
  %821 = vmatpush.msra.mxu0 0.0
  %822 = vmatpush.msra.mxu0 0.0
  %823 = vmatpush.msra.mxu0 0.0
  %824 = vmatpush.msra.mxu0 0.0
  %v825 = vand.u32 %v486, 4294901760
  %826 = vmatpush.msra.mxu0 %v825
  %v827 = vand.u32 %v485, 4294901760
  %828 = vmatpush.msra.mxu0 %v827
  %v829 = vand.u32 %v484, 4294901760
  %830 = vmatpush.msra.mxu0 %v829
  %v831 = vand.u32 %v483, 4294901760
  %832 = vmatpush.msra.mxu0 %v831
  %v833 = vand.u32 %v482, 4294901760
  %834 = vmatpush.msra.mxu0 %v833
  %v835 = vand.u32 %v481, 4294901760
  %836 = vmatpush.msra.mxu0 %v835
  %v837 = vand.u32 %v480, 4294901760
  %838 = vmatpush.msra.mxu0 %v837
  %v839 = vand.u32 %v479, 4294901760
  %840 = vmatpush.msra.mxu0 %v839
  %v841 = vand.u32 %v517, 4294901760
  %842 = vmatmul.f32.gmra.mxu0 %v841
  %v843 = vpop.f32.mrf.mxu0
  %v844 = vadd.f32 %v803, %v843
  %v845 = vand.u32 %v520, 4294901760
  %846 = vmatmul.f32.gmra.mxu0 %v845
  %v847 = vpop.f32.mrf.mxu0
  %v848 = vadd.f32 %v807, %v847
  %v849 = vand.u32 %v523, 4294901760
  %850 = vmatmul.f32.gmra.mxu0 %v849
  %v851 = vpop.f32.mrf.mxu0
  %v852 = vadd.f32 %v811, %v851
  %v853 = vand.u32 %v526, 4294901760
  %854 = vmatmul.f32.gmra.mxu0 %v853
  %v855 = vpop.f32.mrf.mxu0
  %v856 = vadd.f32 %v815, %v855
  %857 = vdwg.mxu0
  %v858 = vmax.f32 %v844, 0.0
  %v859 = vmax.f32 %v848, 0.0
  %v860 = vmax.f32 %v852, 0.0
  %v861 = vmax.f32 %v856, 0.0
  %v862 = vld [vmem:[%s5] sm:$0xff]
  %v863 = vld [vmem:[%s5 + $0x8] sm:$0xff]
  %v864 = vld [vmem:[%s6] sm:$0xff]
  %v865 = vld [vmem:[%s6 + $0x8] sm:$0xff]
  %867 = vset.pattern.permute.xlu0 0
  %868 = vperm.xlu0 %867, %v864
  %v869 = vpop.permute.xlu0 %868
  %872 = vset.pattern.permute.xlu0 0
  %873 = vperm.xlu0 %872, %v865
  %v874 = vpop.permute.xlu0 %873
  %vm876 = vcmask 261120
  %v878 = vsel %vm876, %v862, 0
  %v881 = vsel %vm876, %v863, 0
  %883 = vmatpush.msra.mxu0 0.0
  %884 = vmatpush.msra.mxu0 0.0
  %885 = vmatpush.msra.mxu0 0.0
  %886 = vmatpush.msra.mxu0 0.0
  %887 = vmatpush.msra.mxu0 0.0
  %888 = vmatpush.msra.mxu0 0.0
  %889 = vmatpush.msra.mxu0 0.0
  %890 = vmatpush.msra.mxu0 0.0
  %891 = vmatpush.msra.mxu0 0.0
  %892 = vmatpush.msra.mxu0 0.0
  %893 = vmatpush.msra.mxu0 0.0
  %894 = vmatpush.msra.mxu0 0.0
  %v895 = vand.u32 %v861, 4294901760
  %896 = vmatpush.msra.mxu0 %v895
  %v897 = vand.u32 %v860, 4294901760
  %898 = vmatpush.msra.mxu0 %v897
  %v899 = vand.u32 %v859, 4294901760
  %900 = vmatpush.msra.mxu0 %v899
  %v901 = vand.u32 %v858, 4294901760
  %902 = vmatpush.msra.mxu0 %v901
  %v903 = vand.u32 %v878, 4294901760
  %v904 = vsub.f32 %v878, %v903
  %v905 = vand.u32 %v904, 4294901760
  %v906 = vsub.f32 %v904, %v905
  %v907 = vand.u32 %v906, 4294901760
  %908 = vmatmul.f32.gmra.mxu0 %v907
  %v909 = vpop.f32.mrf.mxu0
  %v910 = vadd.f32 %v869, %v909
  %v911 = vand.u32 %v881, 4294901760
  %v912 = vsub.f32 %v881, %v911
  %v913 = vand.u32 %v912, 4294901760
  %v914 = vsub.f32 %v912, %v913
  %v915 = vand.u32 %v914, 4294901760
  %916 = vmatmul.f32.gmra.mxu0 %v915
  %v917 = vpop.f32.mrf.mxu0
  %v918 = vadd.f32 %v874, %v917
  %919 = vdwg.mxu0
  %920 = vmatpush.msra.mxu0 0.0
  %921 = vmatpush.msra.mxu0 0.0
  %922 = vmatpush.msra.mxu0 0.0
  %923 = vmatpush.msra.mxu0 0.0
  %924 = vmatpush.msra.mxu0 0.0
  %925 = vmatpush.msra.mxu0 0.0
  %926 = vmatpush.msra.mxu0 0.0
  %927 = vmatpush.msra.mxu0 0.0
  %928 = vmatpush.msra.mxu0 0.0
  %929 = vmatpush.msra.mxu0 0.0
  %930 = vmatpush.msra.mxu0 0.0
  %931 = vmatpush.msra.mxu0 0.0
  %v932 = vand.u32 %v861, 4294901760
  %v933 = vsub.f32 %v861, %v932
  %v934 = vand.u32 %v933, 4294901760
  %v935 = vsub.f32 %v933, %v934
  %v936 = vand.u32 %v935, 4294901760
  %937 = vmatpush.msra.mxu0 %v936
  %v938 = vand.u32 %v860, 4294901760
  %v939 = vsub.f32 %v860, %v938
  %v940 = vand.u32 %v939, 4294901760
  %v941 = vsub.f32 %v939, %v940
  %v942 = vand.u32 %v941, 4294901760
  %943 = vmatpush.msra.mxu0 %v942
  %v944 = vand.u32 %v859, 4294901760
  %v945 = vsub.f32 %v859, %v944
  %v946 = vand.u32 %v945, 4294901760
  %v947 = vsub.f32 %v945, %v946
  %v948 = vand.u32 %v947, 4294901760
  %949 = vmatpush.msra.mxu0 %v948
  %v950 = vand.u32 %v858, 4294901760
  %v951 = vsub.f32 %v858, %v950
  %v952 = vand.u32 %v951, 4294901760
  %v953 = vsub.f32 %v951, %v952
  %v954 = vand.u32 %v953, 4294901760
  %955 = vmatpush.msra.mxu0 %v954
  %v956 = vand.u32 %v878, 4294901760
  %957 = vmatmul.f32.gmra.mxu0 %v956
  %v958 = vpop.f32.mrf.mxu0
  %v959 = vadd.f32 %v910, %v958
  %v960 = vand.u32 %v881, 4294901760
  %961 = vmatmul.f32.gmra.mxu0 %v960
  %v962 = vpop.f32.mrf.mxu0
  %v963 = vadd.f32 %v918, %v962
  %964 = vdwg.mxu0
  %965 = vmatpush.msra.mxu0 0.0
  %966 = vmatpush.msra.mxu0 0.0
  %967 = vmatpush.msra.mxu0 0.0
  %968 = vmatpush.msra.mxu0 0.0
  %969 = vmatpush.msra.mxu0 0.0
  %970 = vmatpush.msra.mxu0 0.0
  %971 = vmatpush.msra.mxu0 0.0
  %972 = vmatpush.msra.mxu0 0.0
  %973 = vmatpush.msra.mxu0 0.0
  %974 = vmatpush.msra.mxu0 0.0
  %975 = vmatpush.msra.mxu0 0.0
  %976 = vmatpush.msra.mxu0 0.0
  %v977 = vand.u32 %v861, 4294901760
  %v978 = vsub.f32 %v861, %v977
  %979 = vmatpush.msra.mxu0 %v978
  %v980 = vand.u32 %v860, 4294901760
  %v981 = vsub.f32 %v860, %v980
  %982 = vmatpush.msra.mxu0 %v981
  %v983 = vand.u32 %v859, 4294901760
  %v984 = vsub.f32 %v859, %v983
  %985 = vmatpush.msra.mxu0 %v984
  %v986 = vand.u32 %v858, 4294901760
  %v987 = vsub.f32 %v858, %v986
  %988 = vmatpush.msra.mxu0 %v987
  %v989 = vand.u32 %v878, 4294901760
  %v990 = vsub.f32 %v878, %v989
  %991 = vmatmul.f32.gmra.mxu0 %v990
  %v992 = vpop.f32.mrf.mxu0
  %v993 = vadd.f32 %v959, %v992
  %v994 = vand.u32 %v881, 4294901760
  %v995 = vsub.f32 %v881, %v994
  %996 = vmatmul.f32.gmra.mxu0 %v995
  %v997 = vpop.f32.mrf.mxu0
  %v998 = vadd.f32 %v963, %v997
  %999 = vdwg.mxu0
  %1000 = vmatpush.msra.mxu0 0.0
  %1001 = vmatpush.msra.mxu0 0.0
  %1002 = vmatpush.msra.mxu0 0.0
  %1003 = vmatpush.msra.mxu0 0.0
  %1004 = vmatpush.msra.mxu0 0.0
  %1005 = vmatpush.msra.mxu0 0.0
  %1006 = vmatpush.msra.mxu0 0.0
  %1007 = vmatpush.msra.mxu0 0.0
  %1008 = vmatpush.msra.mxu0 0.0
  %1009 = vmatpush.msra.mxu0 0.0
  %1010 = vmatpush.msra.mxu0 0.0
  %1011 = vmatpush.msra.mxu0 0.0
  %v1012 = vand.u32 %v861, 4294901760
  %1013 = vmatpush.msra.mxu0 %v1012
  %v1014 = vand.u32 %v860, 4294901760
  %1015 = vmatpush.msra.mxu0 %v1014
  %v1016 = vand.u32 %v859, 4294901760
  %1017 = vmatpush.msra.mxu0 %v1016
  %v1018 = vand.u32 %v858, 4294901760
  %1019 = vmatpush.msra.mxu0 %v1018
  %v1020 = vand.u32 %v878, 4294901760
  %v1021 = vsub.f32 %v878, %v1020
  %v1022 = vand.u32 %v1021, 4294901760
  %1023 = vmatmul.f32.gmra.mxu0 %v1022
  %v1024 = vpop.f32.mrf.mxu0
  %v1025 = vadd.f32 %v993, %v1024
  %v1026 = vand.u32 %v881, 4294901760
  %v1027 = vsub.f32 %v881, %v1026
  %v1028 = vand.u32 %v1027, 4294901760
  %1029 = vmatmul.f32.gmra.mxu0 %v1028
  %v1030 = vpop.f32.mrf.mxu0
  %v1031 = vadd.f32 %v998, %v1030
  %1032 = vdwg.mxu0
  %1033 = vmatpush.msra.mxu0 0.0
  %1034 = vmatpush.msra.mxu0 0.0
  %1035 = vmatpush.msra.mxu0 0.0
  %1036 = vmatpush.msra.mxu0 0.0
  %1037 = vmatpush.msra.mxu0 0.0
  %1038 = vmatpush.msra.mxu0 0.0
  %1039 = vmatpush.msra.mxu0 0.0
  %1040 = vmatpush.msra.mxu0 0.0
  %1041 = vmatpush.msra.mxu0 0.0
  %1042 = vmatpush.msra.mxu0 0.0
  %1043 = vmatpush.msra.mxu0 0.0
  %1044 = vmatpush.msra.mxu0 0.0
  %v1045 = vand.u32 %v861, 4294901760
  %v1046 = vsub.f32 %v861, %v1045
  %v1047 = vand.u32 %v1046, 4294901760
  %1048 = vmatpush.msra.mxu0 %v1047
  %v1049 = vand.u32 %v860, 4294901760
  %v1050 = vsub.f32 %v860, %v1049
  %v1051 = vand.u32 %v1050, 4294901760
  %1052 = vmatpush.msra.mxu0 %v1051
  %v1053 = vand.u32 %v859, 4294901760
  %v1054 = vsub.f32 %v859, %v1053
  %v1055 = vand.u32 %v1054, 4294901760
  %1056 = vmatpush.msra.mxu0 %v1055
  %v1057 = vand.u32 %v858, 4294901760
  %v1058 = vsub.f32 %v858, %v1057
  %v1059 = vand.u32 %v1058, 4294901760
  %1060 = vmatpush.msra.mxu0 %v1059
  %v1061 = vand.u32 %v878, 4294901760
  %1062 = vmatmul.f32.gmra.mxu0 %v1061
  %v1063 = vpop.f32.mrf.mxu0
  %v1064 = vadd.f32 %v1025, %v1063
  %v1065 = vand.u32 %v881, 4294901760
  %1066 = vmatmul.f32.gmra.mxu0 %v1065
  %v1067 = vpop.f32.mrf.mxu0
  %v1068 = vadd.f32 %v1031, %v1067
  %1069 = vdwg.mxu0
  %1070 = vmatpush.msra.mxu0 0.0
  %1071 = vmatpush.msra.mxu0 0.0
  %1072 = vmatpush.msra.mxu0 0.0
  %1073 = vmatpush.msra.mxu0 0.0
  %1074 = vmatpush.msra.mxu0 0.0
  %1075 = vmatpush.msra.mxu0 0.0
  %1076 = vmatpush.msra.mxu0 0.0
  %1077 = vmatpush.msra.mxu0 0.0
  %1078 = vmatpush.msra.mxu0 0.0
  %1079 = vmatpush.msra.mxu0 0.0
  %1080 = vmatpush.msra.mxu0 0.0
  %1081 = vmatpush.msra.mxu0 0.0
  %v1082 = vand.u32 %v861, 4294901760
  %1083 = vmatpush.msra.mxu0 %v1082
  %v1084 = vand.u32 %v860, 4294901760
  %1085 = vmatpush.msra.mxu0 %v1084
  %v1086 = vand.u32 %v859, 4294901760
  %1087 = vmatpush.msra.mxu0 %v1086
  %v1088 = vand.u32 %v858, 4294901760
  %1089 = vmatpush.msra.mxu0 %v1088
  %v1090 = vand.u32 %v878, 4294901760
  %1091 = vmatmul.f32.gmra.mxu0 %v1090
  %v1092 = vpop.f32.mrf.mxu0
  %v1093 = vadd.f32 %v1064, %v1092
  %v1094 = vand.u32 %v881, 4294901760
  %1095 = vmatmul.f32.gmra.mxu0 %v1094
  %v1096 = vpop.f32.mrf.mxu0
  %v1097 = vadd.f32 %v1068, %v1096
  %1098 = vdwg.mxu0
  %v1099 = vmax.f32 %v1093, 0.0
  %v1100 = vmax.f32 %v1097, 0.0
  %v1101 = vld [vmem:[%s7] sm:$0xff]
  %v1102 = vld [vmem:[%s7 + $0x8] sm:$0xff]
  %1104 = vset.pattern.permute.xlu0 0
  %1105 = vperm.xlu0 %1104, %v1101
  %v1106 = vpop.permute.xlu0 %1105
  %1109 = vset.pattern.permute.xlu0 0
  %1110 = vperm.xlu0 %1109, %v1102
  %v1111 = vpop.permute.xlu0 %1110
  %v1113 = vmul.f32 %v1099, %v1106
  %v1114 = vmul.f32 %v1100, %v1111
  %v1115 = vadd.f32 %v1113, %v1114
  %v1116 = vrot.slane %v1115, 4
  %v1117 = vadd.f32 %v1115, %v1116
  %v1118 = vrot.slane %v1117, 2
  %v1119 = vadd.f32 %v1117, %v1118
  %v1120 = vrot.slane %v1119, 1
  %v1121 = vadd.f32 %v1119, %v1120
  %v1122 = vld [vmem:[#allocation2] sm:$0x1]
  %1124 = vset.pattern.permute.xlu0 0
  %1125 = vperm.xlu0 %1124, %v1122
  %v1126 = vpop.permute.xlu0 %1125
  %v1128 = vperm.slane %v1126, 0
  %v1129 = vadd.f32 %v1121, %v1128
  %1130 = vst [vmem:[%s9] sm:$0x1] %v1129
  // Predicated region
  $region38: #{mlp_forward.1} parent=0 // pred_check
    _
  $region39: #{mlp_forward.1} parent=0 // pred_check_branch
    %1132 = sbr.rel (0) target = $region41
  $region40: #{mlp_forward.1} parent=0 // pred_region
    _
  $region41: #{mlp_forward.1} parent=0 // pred_fallthru
    _
  // Predicated region
  $region42: #{mlp_forward.1} parent=0 // pred_check
    _
  $region43: #{mlp_forward.1} parent=0 // pred_check_branch
    %1134 = sbr.rel (0) target = $region45
  $region44: #{mlp_forward.1} parent=0 // pred_region
    _
  $region45: #{mlp_forward.1} parent=0 // pred_fallthru
    _

</llo_original>
